<compile_context>
chip_gen: v5e
topology: v5e:2x2
jax: 0.10.0
libtpu: 0.0.40
codegen_flags: <defaults>
</compile_context>

<pallas_src>
import functools
import math

import jax
import jax.numpy as jnp
import numpy as np
from jax.experimental import pallas as pl
from jax.experimental.pallas import tpu as pltpu


def _layer_norm(x, gamma, beta, eps=1e-5):
    mu = jnp.mean(x, axis=-1, keepdims=True)
    var = jnp.mean(jnp.square(x - mu), axis=-1, keepdims=True)
    return (x - mu) * (jax.lax.rsqrt(var + eps) * gamma) + beta


def _ln_lstm_cell(pre, c_prev, gg, bg, gc, bc, hidden):
    """Layer-norm LSTM cell; fused gate columns are laid out [i | f | o | g]."""
    H = hidden
    gates = _layer_norm(pre, gg, bg)                     # [B, 4H]
    sig = jax.nn.sigmoid(gates[:, 0:3 * H])              # i, f, o in one slice
    g = jnp.tanh(gates[:, 3 * H:4 * H])                  # g only
    i = sig[:, 0:H]
    f = sig[:, H:2 * H]
    o = sig[:, 2 * H:3 * H]
    c_new = f * c_prev + i * g
    h_new = o * jnp.tanh(_layer_norm(c_new, gc, bc))
    return h_new, c_new


def _kp_lstm_prob_kernel(
    hidden, cluster_n, dur_dim, dur_categorical,
    # --- inputs ---
    x_ref,       # [1, B, 12H] f32   precomputed input projection (+ fused biases), step t
    hc0_ref,     # [B, 2*HP]   f32   initial state [h1|h2|h3|0 | c1|c2|c3|0]
    w_rec_ref,   # [HP, 12H]   bf16  block-diag [w_hh1 | w_hh2 | w_hh3]
    w_misc_ref,  # [3H, MW]    bf16  rows: [w_ih2[:H] ; w_ih3 ; w_head(prob|dur)]
    par_ref,     # [16, PW]    f32   LN gammas/betas + head bias, packed
    # --- output ---
    out_ref,     # [1, B, HEADW + 2*HP] f32  per-step slab [head | h1 h2 h3 0 | c1 c2 c3 0]
    # --- scratch ---
    hc_scr,      # [B, 2*HP]   f32   VMEM-resident carried state
):
    H = hidden
    G = 4 * H
    HP = ((3 * H + 127) // 128) * 128
    PADW = HP - 3 * H
    HEADW = ((cluster_n + dur_dim + 127) // 128) * 128

    t = pl.program_id(0)

    @pl.when(t == 0)
    def _():
        hc_scr[...] = hc0_ref[...]

    hc = hc_scr[...]
    h_prev = hc[:, 0:HP].astype(jnp.bfloat16)            # [h1|h2|h3|0] of step t-1
    c1p = hc[:, HP + 0 * H: HP + 1 * H]
    c2p = hc[:, HP + 1 * H: HP + 2 * H]
    c3p = hc[:, HP + 2 * H: HP + 3 * H]

    par = par_ref[...]

    # One MXU dot for all three previous-h gate contributions (block-diag weight);
    # x_ref already contains the input projections and all three cell biases.
    pre_all = x_ref[0] + jnp.dot(h_prev, w_rec_ref[...],
                                 preferred_element_type=jnp.float32)   # [B, 12H]

    # ---- layer 1: cell_cc(kp_label, (h0[0], c0[0])) ----
    h1, c1 = _ln_lstm_cell(pre_all[:, 0:G], c1p,
                           par[0:1, 0:G], par[1:2, 0:G],
                           par[6:7, 0:H], par[7:8, 0:H], H)

    # ---- layer 2: cell_concat(cat([h1, duration]), (h0[1], c0[1])) ----
    pre2 = pre_all[:, G:2 * G] + jnp.dot(h1.astype(jnp.bfloat16),
                                         w_misc_ref[0:H, 0:G],
                                         preferred_element_type=jnp.float32)
    h2, c2 = _ln_lstm_cell(pre2, c2p,
                           par[2:3, 0:G], par[3:4, 0:G],
                           par[8:9, 0:H], par[9:10, 0:H], H)

    # ---- layer 3: cell_concat2(h2, (h0[2], c0[2])) ----
    pre3 = pre_all[:, 2 * G:3 * G] + jnp.dot(h2.astype(jnp.bfloat16),
                                             w_misc_ref[H:2 * H, 0:G],
                                             preferred_element_type=jnp.float32)
    h3, c3 = _ln_lstm_cell(pre3, c3p,
                           par[4:5, 0:G], par[5:6, 0:G],
                           par[10:11, 0:H], par[11:12, 0:H], H)

    # ---- fused output heads [prob | duration], lane-padded to HEADW ----
    head = jnp.dot(h3.astype(jnp.bfloat16), w_misc_ref[2 * H:3 * H, 0:HEADW],
                   preferred_element_type=jnp.float32) + par[12:13, 0:HEADW]
    if not dur_categorical:   # matches `if not self.dur_categorical: relu(duration)`
        lane = jax.lax.broadcasted_iota(jnp.int32, head.shape, 1)
        head = jnp.where((lane >= cluster_n) & (lane < cluster_n + dur_dim),
                         jnp.maximum(head, 0.0), head)

    pad = ([jnp.zeros((h1.shape[0], PADW), jnp.float32)] if PADW else [])
    hc_new = jnp.concatenate([h1, h2, h3] + pad + [c1, c2, c3] + pad, axis=-1)
    hc_scr[...] = hc_new
    # Single lane-dense store for everything this step produces.
    out_ref[0] = jnp.concatenate([head, hc_new], axis=-1)


class KPLSTMProb:
    """JAX/Pallas port of KP_LSTM_Prob (3 layer-norm recurrent cells + 2 heads)."""

    def __init__(self, cluster_n, hidden_size, dur_cat_dim,
                 dur_categorical=True, key=jax.random.PRNGKey(0)):
        assert hidden_size % 32 == 0, "4*hidden must be a multiple of 128 lanes"
        self.cluster_n = cluster_n
        self.hidden_size = hidden_size
        self.dur_dim = dur_cat_dim
        self.dur_categorical = dur_categorical

        H, C, D = hidden_size, cluster_n, dur_cat_dim
        keys = jax.random.split(key, 8)
        bound = 1.0 / math.sqrt(H)

        def u(k, shape, b):
            return jax.random.uniform(k, shape, jnp.float32, -b, b)

        def init_cell(k, input_size):
            k0, k1, k2 = jax.random.split(k, 3)
            return dict(
                w_ih=u(k0, (input_size, 4 * H), bound),   # stored [in, 4H], gate order [i|f|g|o]
                w_hh=u(k1, (H, 4 * H), bound),
                b=u(k2, (1, 4 * H), bound),
                gg=jnp.ones((1, 4 * H), jnp.float32),
                bg=jnp.zeros((1, 4 * H), jnp.float32),
                gc=jnp.ones((1, H), jnp.float32),
                bc=jnp.zeros((1, H), jnp.float32),
            )

        self.cell_cc = init_cell(keys[0], C)
        self.cell_concat = init_cell(keys[1], H + D)
        self.cell_concat2 = init_cell(keys[2], H)

        # nn.Linear(H, cluster_n) / nn.Linear(H, dur_dim), stored transposed.
        self.w_l1 = u(keys[3], (H, C), bound)
        self.b_l1 = u(keys[4], (1, C), bound)
        self.w_l2 = u(keys[5], (H, D), bound)
        self.b_l2 = u(keys[6], (1, D), bound)

        self._build_fused_params()

    # ------------------------------------------------------------------ fusion
    def _build_fused_params(self):
        H, C, D = self.hidden_size, self.cluster_n, self.dur_dim
        G = 4 * H
        self.HP = ((3 * H + 127) // 128) * 128
        self.HEADW = ((C + D + 127) // 128) * 128
        HP, HEADW = self.HP, self.HEADW

        def perm(w):  # gate-column reorder [i|f|g|o] -> [i|f|o|g]
            return jnp.concatenate([w[..., 0:2 * H], w[..., 3 * H:4 * H],
                                    w[..., 2 * H:3 * H]], axis=-1)

        c1, c2, c3 = self.cell_cc, self.cell_concat, self.cell_concat2

        # Sequence-static input projection weight (used OUTSIDE the kernel).
        # Rows: [kp_label(C) | duration(D) | 1]; the ones row carries b1|b2|b3.
        w_in = jnp.zeros((C + D + 1, 3 * G), jnp.float32)
        w_in = w_in.at[0:C, 0:G].set(perm(c1["w_ih"]))
        w_in = w_in.at[C:C + D, G:2 * G].set(perm(c2["w_ih"][H:, :]))
        w_in = w_in.at[C + D, 0:G].set(perm(c1["b"])[0])
        w_in = w_in.at[C + D, G:2 * G].set(perm(c2["b"])[0])
        w_in = w_in.at[C + D, 2 * G:3 * G].set(perm(c3["b"])[0])
        self.w_in = w_in

        # Block-diagonal recurrent weight (previous-step h), rows padded to HP, bf16.
        w_rec = jnp.zeros((HP, 3 * G), jnp.float32)
        w_rec = w_rec.at[0 * H:1 * H, 0:G].set(perm(c1["w_hh"]))
        w_rec = w_rec.at[1 * H:2 * H, G:2 * G].set(perm(c2["w_hh"]))
        w_rec = w_rec.at[2 * H:3 * H, 2 * G:3 * G].set(perm(c3["w_hh"]))
        self.w_rec = w_rec.astype(jnp.bfloat16)

        # Current-step h weights + fused output heads, bf16.
        MW = max(G, HEADW)
        w_misc = jnp.zeros((3 * H, MW), jnp.float32)
        w_misc = w_misc.at[0:H, 0:G].set(perm(c2["w_ih"][:H, :]))
        w_misc = w_misc.at[H:2 * H, 0:G].set(perm(c3["w_ih"]))
        w_misc = w_misc.at[2 * H:3 * H, 0:C].set(self.w_l1)
        w_misc = w_misc.at[2 * H:3 * H, C:C + D].set(self.w_l2)
        self.w_misc = w_misc.astype(jnp.bfloat16)

        # All tiny parameters packed into one padded array.
        PW = max(G, HEADW)
        par = jnp.zeros((16, PW), jnp.float32)
        for r, v in enumerate([perm(c1["gg"]), perm(c1["bg"]),
                               perm(c2["gg"]), perm(c2["bg"]),
                               perm(c3["gg"]), perm(c3["bg"])]):
            par = par.at[r, 0:G].set(v[0])
        for r, v in enumerate([c1["gc"], c1["bc"], c2["gc"], c2["bc"],
                               c3["gc"], c3["bc"]]):
            par = par.at[6 + r, 0:H].set(v[0])
        par = par.at[12, 0:C].set(self.b_l1[0])
        par = par.at[12, C:C + D].set(self.b_l2[0])
        self.params = par

    # --------------------------------------------------------------- utilities
    def init_hidden(self, batch_size):
        z = jnp.zeros((batch_size, self.hidden_size), jnp.float32)
        return [z, z, z], [z, z, z]

    def _pack_state(self, hidden_states, cell_states):
        B = hidden_states[0].shape[0]
        pad = jnp.zeros((B, self.HP - 3 * self.hidden_size), jnp.float32)
        return jnp.concatenate(list(hidden_states) + [pad] +
                               list(cell_states) + [pad], axis=1)

    def _unpack(self, slab):
        H, C, D = self.hidden_size, self.cluster_n, self.dur_dim
        base = self.HEADW
        prob = slab[:, 0:C]
        dur = slab[:, C:C + D]
        hs = [slab[:, base + k * H: base + (k + 1) * H] for k in range(3)]
        cs = [slab[:, base + self.HP + k * H: base + self.HP + (k + 1) * H]
              for k in range(3)]
        return prob, dur, hs, cs

    def _run(self, x_proj, hc0):
        T, B, GW = x_proj.shape
        OW = self.HEADW + 2 * self.HP
        kern = functools.partial(_kp_lstm_prob_kernel, self.hidden_size,
                                 self.cluster_n, self.dur_dim, self.dur_categorical)
        return pl.pallas_call(
            kern,
            out_shape=jax.ShapeDtypeStruct((T, B, OW), jnp.float32),
            grid=(T,),
            in_specs=[
                pl.BlockSpec((1, B, GW), lambda t: (t, 0, 0)),        # streamed per step
                pl.BlockSpec(hc0.shape, lambda t: (0, 0)),            # resident
                pl.BlockSpec(self.w_rec.shape, lambda t: (0, 0)),     # resident
                pl.BlockSpec(self.w_misc.shape, lambda t: (0, 0)),    # resident
                pl.BlockSpec(self.params.shape, lambda t: (0, 0)),    # resident
            ],
            out_specs=pl.BlockSpec((1, B, OW), lambda t: (t, 0, 0)),
            scratch_shapes=[pltpu.VMEM((B, 2 * self.HP), jnp.float32)],
            compiler_params=pltpu.CompilerParams(
                dimension_semantics=("arbitrary",)),                  # serial recurrence
        )(x_proj, hc0, self.w_rec, self.w_misc, self.params)

    # ------------------------------------------------------------ forward paths
    def __call__(self, kp_input, state_tuple):
        """Single recurrent step (matches the PyTorch module's forward())."""
        _, kp_label, _, duration = kp_input
        hidden_states, cell_states = state_tuple
        B = kp_label.shape[0]
        x_aug = jnp.concatenate(
            [kp_label, duration, jnp.ones((B, 1), jnp.float32)], axis=1)
        x_proj = jnp.dot(x_aug, self.w_in,
                         preferred_element_type=jnp.float32)[None]   # [1, B, 12H]
        hc0 = self._pack_state(hidden_states, cell_states)
        slab = self._run(x_proj, hc0)[0]
        prob, dur, new_h, new_c = self._unpack(slab)
        return (None, prob, dur, (new_h, new_c))

    def forward_sequence(self, kp_label_seq, duration_seq, state_tuple):
        """Run T recurrent steps inside ONE pallas_call (state stays in VMEM)."""
        T, B = kp_label_seq.shape[:2]
        ones = jnp.ones((T, B, 1), jnp.float32)
        x_aug = jnp.concatenate([kp_label_seq, duration_seq, ones], axis=-1)
        x_proj = jnp.dot(x_aug.reshape(T * B, -1), self.w_in,
                         preferred_element_type=jnp.float32).reshape(T, B, -1)
        hc0 = self._pack_state(*state_tuple)
        slabs = self._run(x_proj, hc0)
        probs = slabs[:, :, 0:self.cluster_n]
        durs = slabs[:, :, self.cluster_n:self.cluster_n + self.dur_dim]
        _, _, hT, cT = self._unpack(slabs[-1])
        return probs, durs, (hT, cT)


def _reference_forward(model, kp_label, duration, hidden_states, cell_states):
    """Unfused pure-JAX f32 forward mirroring the original per-cell math."""
    H = model.hidden_size

    def ln(x, g, b, eps=1e-5):
        mu = jnp.mean(x, axis=-1, keepdims=True)
        var = jnp.mean((x - mu) ** 2, axis=-1, keepdims=True)
        return (x - mu) / jnp.sqrt(var + eps) * g + b

    def cell(p, x, h, c):
        pre = x @ p["w_ih"] + h @ p["w_hh"] + p["b"]
        gates = ln(pre, p["gg"], p["bg"])
        i = jax.nn.sigmoid(gates[:, 0 * H:1 * H])
        f = jax.nn.sigmoid(gates[:, 1 * H:2 * H])
        g = jnp.tanh(gates[:, 2 * H:3 * H])
        o = jax.nn.sigmoid(gates[:, 3 * H:4 * H])
        c_new = f * c + i * g
        h_new = o * jnp.tanh(ln(c_new, p["gc"], p["bc"]))
        return h_new, c_new

    h1, c1 = cell(model.cell_cc, kp_label, hidden_states[0], cell_states[0])
    h2, c2 = cell(model.cell_concat, jnp.concatenate([h1, duration], axis=1),
                  hidden_states[1], cell_states[1])
    h3, c3 = cell(model.cell_concat2, h2, hidden_states[2], cell_states[2])
    prob = h3 @ model.w_l1 + model.b_l1
    dur = h3 @ model.w_l2 + model.b_l2
    if not model.dur_categorical:
        dur = jnp.maximum(dur, 0.0)
    return prob, dur, [h1, h2, h3], [c1, c2, c3]


if __name__ == "__main__":
    B = 8            # batch
    CLUSTER_N = 16   # cluster_n
    HIDDEN = 32      # hidden_size
    DUR_DIM = 8      # dur_cat_dim
    T = 8            # sequence length for the fused-sequence path

    key = jax.random.PRNGKey(0)
    k_model, k_label, k_dur, k_seq1, k_seq2 = jax.random.split(key, 5)

    model = KPLSTMProb(CLUSTER_N, HIDDEN, DUR_DIM, dur_categorical=True, key=k_model)

    kp_label = jax.nn.one_hot(
        jax.random.randint(k_label, (B,), 0, CLUSTER_N), CLUSTER_N
    ).astype(jnp.float32)                                           # [B, cluster_n]
    duration = jax.random.normal(k_dur, (B, DUR_DIM), jnp.float32)  # [B, dur_dim]

    hidden_states, cell_states = model.init_hidden(B)

    # --- step 1 (zero initial state) vs. f32 reference ---
    _, prob, dur, (new_h, new_c) = model(
        (None, kp_label, None, duration), (hidden_states, cell_states))
    jax.block_until_ready((prob, dur, new_h, new_c))
    assert prob.shape == (B, CLUSTER_N)
    assert dur.shape == (B, DUR_DIM)
    assert len(new_h) == 3 and new_h[0].shape == (B, HIDDEN)
    assert len(new_c) == 3 and new_c[0].shape == (B, HIDDEN)

    r_prob, r_dur, r_h, r_c = _reference_forward(
        model, kp_label, duration, hidden_states, cell_states)
    np.testing.assert_allclose(prob, r_prob, rtol=5e-2, atol=5e-2)
    np.testing.assert_allclose(dur, r_dur, rtol=5e-2, atol=5e-2)
    for a, b in zip(new_h, r_h):
        np.testing.assert_allclose(a, b, rtol=5e-2, atol=5e-2)
    for a, b in zip(new_c, r_c):
        np.testing.assert_allclose(a, b, rtol=5e-2, atol=5e-2)

    # --- step 2 (non-zero carried state, same state fed to kernel & reference) ---
    state2 = ([jnp.asarray(h) for h in new_h], [jnp.asarray(c) for c in new_c])
    _, prob2, dur2, (new_h2, new_c2) = model(
        (None, kp_label, None, duration), state2)
    jax.block_until_ready((prob2, dur2, new_h2, new_c2))
    r_prob2, r_dur2, r_h2, r_c2 = _reference_forward(
        model, kp_label, duration, state2[0], state2[1])
    np.testing.assert_allclose(prob2, r_prob2, rtol=5e-2, atol=5e-2)
    np.testing.assert_allclose(dur2, r_dur2, rtol=5e-2, atol=5e-2)
    for a, b in zip(new_h2, r_h2):
        np.testing.assert_allclose(a, b, rtol=5e-2, atol=5e-2)
    for a, b in zip(new_c2, r_c2):
        np.testing.assert_allclose(a, b, rtol=5e-2, atol=5e-2)

    # --- fused T-step sequence (one pallas_call) vs. T single-step kernel calls ---
    kp_seq = jax.nn.one_hot(
        jax.random.randint(k_seq1, (T, B), 0, CLUSTER_N), CLUSTER_N
    ).astype(jnp.float32)                                               # [T, B, C]
    dur_seq = jax.random.normal(k_seq2, (T, B, DUR_DIM), jnp.float32)   # [T, B, D]

    probs_seq, durs_seq, (hT, cT) = model.forward_sequence(
        kp_seq, dur_seq, model.init_hidden(B))
    jax.block_until_ready((probs_seq, durs_seq, hT, cT))
    assert probs_seq.shape == (T, B, CLUSTER_N)
    assert durs_seq.shape == (T, B, DUR_DIM)

    h, c = model.init_hidden(B)
    for t in range(T):
        _, p_t, d_t, (h, c) = model((None, kp_seq[t], None, dur_seq[t]), (h, c))
        np.testing.assert_allclose(probs_seq[t], p_t, rtol=1e-2, atol=1e-2)
        np.testing.assert_allclose(durs_seq[t], d_t, rtol=1e-2, atol=1e-2)
    for a, b in zip(hT, h):
        np.testing.assert_allclose(a, b, rtol=1e-2, atol=1e-2)
    for a, b in zip(cT, c):
        np.testing.assert_allclose(a, b, rtol=1e-2, atol=1e-2)

    print("KERNEL_OK")
</pallas_src>

<mosaic_0001>
module attributes {stable_mosaic.version = 11 : i64} {
  func.func @_kp_lstm_prob_kernel(%arg0: i32, %arg1: memref<1x8x384xf32, #tpu.memory_space<vmem>>, %arg2: memref<8x256xf32, #tpu.memory_space<vmem>>, %arg3: memref<128x384xbf16, #tpu.memory_space<vmem>>, %arg4: memref<96x128xbf16, #tpu.memory_space<vmem>>, %arg5: memref<16x128xf32, #tpu.memory_space<vmem>>, %arg6: memref<1x8x384xf32, #tpu.memory_space<vmem>>, %arg7: memref<8x256xf32, #tpu.memory_space<vmem>>) attributes {dimension_semantics = [#tpu.dimension_semantics<arbitrary>], iteration_bounds = array<i64: 1>, scalar_prefetch = 0 : i64, scratch_operands = 1 : i64, tpu.core_type = #tpu.core_type<tc>, window_params = [{transform_indices = @transform_0, window_bounds = array<i64: 1, 8, 384>}, {pipeline_mode = #tpu.pipeline_mode<synchronous>, transform_indices = @transform_1, window_bounds = array<i64: 8, 256>}, {pipeline_mode = #tpu.pipeline_mode<synchronous>, transform_indices = @transform_2, window_bounds = array<i64: 128, 384>}, {pipeline_mode = #tpu.pipeline_mode<synchronous>, transform_indices = @transform_3, window_bounds = array<i64: 96, 128>}, {pipeline_mode = #tpu.pipeline_mode<synchronous>, transform_indices = @transform_4, window_bounds = array<i64: 16, 128>}, {transform_indices = @transform_5, window_bounds = array<i64: 1, 8, 384>}]} {
    %c0_i32 = arith.constant 0 : i32
    %0 = arith.cmpi eq, %arg0, %c0_i32 : i32
    %1 = arith.extui %0 : i1 to i32
    %c0_i32_0 = arith.constant 0 : i32
    %2 = arith.cmpi ne, %1, %c0_i32_0 : i32
    scf.if %2 {
      %c0_55 = arith.constant 0 : index
      %c0_56 = arith.constant 0 : index
      %231 = vector.load %arg2[%c0_55, %c0_56] : memref<8x256xf32, #tpu.memory_space<vmem>>, vector<8x256xf32>
      %c0_57 = arith.constant 0 : index
      %c0_58 = arith.constant 0 : index
      %232 = vector.load %arg7[%c0_57, %c0_58] : memref<8x256xf32, #tpu.memory_space<vmem>>, vector<8x256xf32>
      tpu.vector_store %arg7[%c0_57, %c0_58], %231 {strides = array<i32>} : memref<8x256xf32, #tpu.memory_space<vmem>>, vector<8x256xf32>,
    } else {
    }
    %c0 = arith.constant 0 : index
    %c0_1 = arith.constant 0 : index
    %3 = vector.load %arg7[%c0, %c0_1] : memref<8x256xf32, #tpu.memory_space<vmem>>, vector<8x256xf32>
    %4 = vector.extract_strided_slice %3 {offsets = [0, 0], sizes = [8, 128], strides = [1, 1]} : vector<8x256xf32> to vector<8x128xf32>
    %5 = arith.truncf %4 : vector<8x128xf32> to vector<8x128xbf16>
    %6 = vector.extract_strided_slice %3 {offsets = [0, 128], sizes = [8, 32], strides = [1, 1]} : vector<8x256xf32> to vector<8x32xf32>
    %7 = vector.extract_strided_slice %3 {offsets = [0, 160], sizes = [8, 32], strides = [1, 1]} : vector<8x256xf32> to vector<8x32xf32>
    %8 = vector.extract_strided_slice %3 {offsets = [0, 192], sizes = [8, 32], strides = [1, 1]} : vector<8x256xf32> to vector<8x32xf32>
    %c0_2 = arith.constant 0 : index
    %c0_3 = arith.constant 0 : index
    %9 = vector.load %arg5[%c0_2, %c0_3] : memref<16x128xf32, #tpu.memory_space<vmem>>, vector<16x128xf32>
    %c0_4 = arith.constant 0 : index
    %c0_5 = arith.constant 0 : index
    %c0_6 = arith.constant 0 : index
    %10 = vector.load %arg1[%c0_4, %c0_5, %c0_6] : memref<1x8x384xf32, #tpu.memory_space<vmem>>, vector<1x8x384xf32>
    %11 = vector.shape_cast %10 : vector<1x8x384xf32> to vector<8x384xf32>
    %c0_7 = arith.constant 0 : index
    %c0_8 = arith.constant 0 : index
    %12 = vector.load %arg3[%c0_7, %c0_8] : memref<128x384xbf16, #tpu.memory_space<vmem>>, vector<128x384xbf16>
    %cst = arith.constant dense<0.000000e+00> : vector<8x384xf32>
    %13 = tpu.matmul %5, %12, %cst {dimension_numbers = #tpu.dot_dimension_numbers<[1], [0], [0], [1], [0, 0, 1, 1], [], []>} : vector<8x128xbf16>, vector<128x384xbf16>, vector<8x384xf32> -> vector<8x384xf32>
    %14 = arith.addf %11, %13 : vector<8x384xf32>
    %15 = vector.extract_strided_slice %14 {offsets = [0, 0], sizes = [8, 128], strides = [1, 1]} : vector<8x384xf32> to vector<8x128xf32>
    %16 = vector.extract_strided_slice %9 {offsets = [0, 0], sizes = [1, 128], strides = [1, 1]} : vector<16x128xf32> to vector<1x128xf32>
    %17 = vector.extract_strided_slice %9 {offsets = [1, 0], sizes = [1, 128], strides = [1, 1]} : vector<16x128xf32> to vector<1x128xf32>
    %18 = vector.extract_strided_slice %9 {offsets = [6, 0], sizes = [1, 32], strides = [1, 1]} : vector<16x128xf32> to vector<1x32xf32>
    %19 = vector.extract_strided_slice %9 {offsets = [7, 0], sizes = [1, 32], strides = [1, 1]} : vector<16x128xf32> to vector<1x32xf32>
    %cst_9 = arith.constant dense<0.000000e+00> : vector<8xf32>
    %20 = vector.multi_reduction <add>, %15, %cst_9 [1] : vector<8x128xf32> to vector<8xf32>
    %21 = vector.shape_cast %20 : vector<8xf32> to vector<8x1xf32>
    %cst_10 = arith.constant 1.280000e+02 : f32
    %22 = vector.broadcast %cst_10 : f32 to vector<8x1xf32>
    %23 = arith.divf %21, %22 : vector<8x1xf32>
    %24 = vector.broadcast %23 : vector<8x1xf32> to vector<8x128xf32>
    %25 = arith.subf %15, %24 : vector<8x128xf32>
    %26 = arith.mulf %25, %25 : vector<8x128xf32>
    %cst_11 = arith.constant dense<0.000000e+00> : vector<8xf32>
    %27 = vector.multi_reduction <add>, %26, %cst_11 [1] : vector<8x128xf32> to vector<8xf32>
    %28 = vector.shape_cast %27 : vector<8xf32> to vector<8x1xf32>
    %cst_12 = arith.constant 1.280000e+02 : f32
    %29 = vector.broadcast %cst_12 : f32 to vector<8x1xf32>
    %30 = arith.divf %28, %29 : vector<8x1xf32>
    %31 = vector.broadcast %23 : vector<8x1xf32> to vector<8x128xf32>
    %32 = arith.subf %15, %31 : vector<8x128xf32>
    %cst_13 = arith.constant 9.99999974E-6 : f32
    %33 = vector.broadcast %cst_13 : f32 to vector<8x1xf32>
    %34 = arith.addf %30, %33 : vector<8x1xf32>
    %35 = math.rsqrt %34 : vector<8x1xf32>
    %36 = vector.broadcast %35 : vector<8x1xf32> to vector<8x128xf32>
    %37 = vector.broadcast %16 : vector<1x128xf32> to vector<8x128xf32>
    %38 = arith.mulf %36, %37 : vector<8x128xf32>
    %39 = arith.mulf %32, %38 : vector<8x128xf32>
    %40 = vector.broadcast %17 : vector<1x128xf32> to vector<8x128xf32>
    %41 = arith.addf %39, %40 : vector<8x128xf32>
    %42 = vector.extract_strided_slice %41 {offsets = [0, 0], sizes = [8, 96], strides = [1, 1]} : vector<8x128xf32> to vector<8x96xf32>
    %43 = arith.negf %42 : vector<8x96xf32>
    %44 = math.exp %43 : vector<8x96xf32>
    %cst_14 = arith.constant 1.000000e+00 : f32
    %45 = vector.broadcast %cst_14 : f32 to vector<8x96xf32>
    %46 = arith.addf %45, %44 : vector<8x96xf32>
    %47 = arith.divf %45, %46 : vector<8x96xf32>
    %48 = vector.extract_strided_slice %41 {offsets = [0, 96], sizes = [8, 32], strides = [1, 1]} : vector<8x128xf32> to vector<8x32xf32>
    %49 = math.tanh %48 : vector<8x32xf32>
    %50 = vector.extract_strided_slice %47 {offsets = [0, 0], sizes = [8, 32], strides = [1, 1]} : vector<8x96xf32> to vector<8x32xf32>
    %51 = vector.extract_strided_slice %47 {offsets = [0, 32], sizes = [8, 32], strides = [1, 1]} : vector<8x96xf32> to vector<8x32xf32>
    %52 = vector.extract_strided_slice %47 {offsets = [0, 64], sizes = [8, 32], strides = [1, 1]} : vector<8x96xf32> to vector<8x32xf32>
    %53 = arith.mulf %51, %6 : vector<8x32xf32>
    %54 = arith.mulf %50, %49 : vector<8x32xf32>
    %55 = arith.addf %53, %54 : vector<8x32xf32>
    %cst_15 = arith.constant dense<0.000000e+00> : vector<8xf32>
    %56 = vector.multi_reduction <add>, %55, %cst_15 [1] : vector<8x32xf32> to vector<8xf32>
    %57 = vector.shape_cast %56 : vector<8xf32> to vector<8x1xf32>
    %cst_16 = arith.constant 3.200000e+01 : f32
    %58 = vector.broadcast %cst_16 : f32 to vector<8x1xf32>
    %59 = arith.divf %57, %58 : vector<8x1xf32>
    %60 = vector.broadcast %59 : vector<8x1xf32> to vector<8x32xf32>
    %61 = arith.subf %55, %60 : vector<8x32xf32>
    %62 = arith.mulf %61, %61 : vector<8x32xf32>
    %cst_17 = arith.constant dense<0.000000e+00> : vector<8xf32>
    %63 = vector.multi_reduction <add>, %62, %cst_17 [1] : vector<8x32xf32> to vector<8xf32>
    %64 = vector.shape_cast %63 : vector<8xf32> to vector<8x1xf32>
    %cst_18 = arith.constant 3.200000e+01 : f32
    %65 = vector.broadcast %cst_18 : f32 to vector<8x1xf32>
    %66 = arith.divf %64, %65 : vector<8x1xf32>
    %67 = vector.broadcast %59 : vector<8x1xf32> to vector<8x32xf32>
    %68 = arith.subf %55, %67 : vector<8x32xf32>
    %cst_19 = arith.constant 9.99999974E-6 : f32
    %69 = vector.broadcast %cst_19 : f32 to vector<8x1xf32>
    %70 = arith.addf %66, %69 : vector<8x1xf32>
    %71 = math.rsqrt %70 : vector<8x1xf32>
    %72 = vector.broadcast %71 : vector<8x1xf32> to vector<8x32xf32>
    %73 = vector.broadcast %18 : vector<1x32xf32> to vector<8x32xf32>
    %74 = arith.mulf %72, %73 : vector<8x32xf32>
    %75 = arith.mulf %68, %74 : vector<8x32xf32>
    %76 = vector.broadcast %19 : vector<1x32xf32> to vector<8x32xf32>
    %77 = arith.addf %75, %76 : vector<8x32xf32>
    %78 = math.tanh %77 : vector<8x32xf32>
    %79 = arith.mulf %52, %78 : vector<8x32xf32>
    %80 = vector.extract_strided_slice %14 {offsets = [0, 128], sizes = [8, 128], strides = [1, 1]} : vector<8x384xf32> to vector<8x128xf32>
    %81 = arith.truncf %79 : vector<8x32xf32> to vector<8x32xbf16>
    %c0_20 = arith.constant 0 : index
    %c0_21 = arith.constant 0 : index
    %82 = vector.load %arg4[%c0_20, %c0_21] : memref<96x128xbf16, #tpu.memory_space<vmem>>, vector<32x128xbf16>
    %cst_22 = arith.constant dense<0.000000e+00> : vector<8x128xf32>
    %83 = tpu.matmul %81, %82, %cst_22 {dimension_numbers = #tpu.dot_dimension_numbers<[1], [0], [0], [1], [0, 0, 1, 1], [], []>} : vector<8x32xbf16>, vector<32x128xbf16>, vector<8x128xf32> -> vector<8x128xf32>
    %84 = arith.addf %80, %83 : vector<8x128xf32>
    %85 = vector.extract_strided_slice %9 {offsets = [2, 0], sizes = [1, 128], strides = [1, 1]} : vector<16x128xf32> to vector<1x128xf32>
    %86 = vector.extract_strided_slice %9 {offsets = [3, 0], sizes = [1, 128], strides = [1, 1]} : vector<16x128xf32> to vector<1x128xf32>
    %87 = vector.extract_strided_slice %9 {offsets = [8, 0], sizes = [1, 32], strides = [1, 1]} : vector<16x128xf32> to vector<1x32xf32>
    %88 = vector.extract_strided_slice %9 {offsets = [9, 0], sizes = [1, 32], strides = [1, 1]} : vector<16x128xf32> to vector<1x32xf32>
    %cst_23 = arith.constant dense<0.000000e+00> : vector<8xf32>
    %89 = vector.multi_reduction <add>, %84, %cst_23 [1] : vector<8x128xf32> to vector<8xf32>
    %90 = vector.shape_cast %89 : vector<8xf32> to vector<8x1xf32>
    %cst_24 = arith.constant 1.280000e+02 : f32
    %91 = vector.broadcast %cst_24 : f32 to vector<8x1xf32>
    %92 = arith.divf %90, %91 : vector<8x1xf32>
    %93 = vector.broadcast %92 : vector<8x1xf32> to vector<8x128xf32>
    %94 = arith.subf %84, %93 : vector<8x128xf32>
    %95 = arith.mulf %94, %94 : vector<8x128xf32>
    %cst_25 = arith.constant dense<0.000000e+00> : vector<8xf32>
    %96 = vector.multi_reduction <add>, %95, %cst_25 [1] : vector<8x128xf32> to vector<8xf32>
    %97 = vector.shape_cast %96 : vector<8xf32> to vector<8x1xf32>
    %cst_26 = arith.constant 1.280000e+02 : f32
    %98 = vector.broadcast %cst_26 : f32 to vector<8x1xf32>
    %99 = arith.divf %97, %98 : vector<8x1xf32>
    %100 = vector.broadcast %92 : vector<8x1xf32> to vector<8x128xf32>
    %101 = arith.subf %84, %100 : vector<8x128xf32>
    %cst_27 = arith.constant 9.99999974E-6 : f32
    %102 = vector.broadcast %cst_27 : f32 to vector<8x1xf32>
    %103 = arith.addf %99, %102 : vector<8x1xf32>
    %104 = math.rsqrt %103 : vector<8x1xf32>
    %105 = vector.broadcast %104 : vector<8x1xf32> to vector<8x128xf32>
    %106 = vector.broadcast %85 : vector<1x128xf32> to vector<8x128xf32>
    %107 = arith.mulf %105, %106 : vector<8x128xf32>
    %108 = arith.mulf %101, %107 : vector<8x128xf32>
    %109 = vector.broadcast %86 : vector<1x128xf32> to vector<8x128xf32>
    %110 = arith.addf %108, %109 : vector<8x128xf32>
    %111 = vector.extract_strided_slice %110 {offsets = [0, 0], sizes = [8, 96], strides = [1, 1]} : vector<8x128xf32> to vector<8x96xf32>
    %112 = arith.negf %111 : vector<8x96xf32>
    %113 = math.exp %112 : vector<8x96xf32>
    %cst_28 = arith.constant 1.000000e+00 : f32
    %114 = vector.broadcast %cst_28 : f32 to vector<8x96xf32>
    %115 = arith.addf %114, %113 : vector<8x96xf32>
    %116 = arith.divf %114, %115 : vector<8x96xf32>
    %117 = vector.extract_strided_slice %110 {offsets = [0, 96], sizes = [8, 32], strides = [1, 1]} : vector<8x128xf32> to vector<8x32xf32>
    %118 = math.tanh %117 : vector<8x32xf32>
    %119 = vector.extract_strided_slice %116 {offsets = [0, 0], sizes = [8, 32], strides = [1, 1]} : vector<8x96xf32> to vector<8x32xf32>
    %120 = vector.extract_strided_slice %116 {offsets = [0, 32], sizes = [8, 32], strides = [1, 1]} : vector<8x96xf32> to vector<8x32xf32>
    %121 = vector.extract_strided_slice %116 {offsets = [0, 64], sizes = [8, 32], strides = [1, 1]} : vector<8x96xf32> to vector<8x32xf32>
    %122 = arith.mulf %120, %7 : vector<8x32xf32>
    %123 = arith.mulf %119, %118 : vector<8x32xf32>
    %124 = arith.addf %122, %123 : vector<8x32xf32>
    %cst_29 = arith.constant dense<0.000000e+00> : vector<8xf32>
    %125 = vector.multi_reduction <add>, %124, %cst_29 [1] : vector<8x32xf32> to vector<8xf32>
    %126 = vector.shape_cast %125 : vector<8xf32> to vector<8x1xf32>
    %cst_30 = arith.constant 3.200000e+01 : f32
    %127 = vector.broadcast %cst_30 : f32 to vector<8x1xf32>
    %128 = arith.divf %126, %127 : vector<8x1xf32>
    %129 = vector.broadcast %128 : vector<8x1xf32> to vector<8x32xf32>
    %130 = arith.subf %124, %129 : vector<8x32xf32>
    %131 = arith.mulf %130, %130 : vector<8x32xf32>
    %cst_31 = arith.constant dense<0.000000e+00> : vector<8xf32>
    %132 = vector.multi_reduction <add>, %131, %cst_31 [1] : vector<8x32xf32> to vector<8xf32>
    %133 = vector.shape_cast %132 : vector<8xf32> to vector<8x1xf32>
    %cst_32 = arith.constant 3.200000e+01 : f32
    %134 = vector.broadcast %cst_32 : f32 to vector<8x1xf32>
    %135 = arith.divf %133, %134 : vector<8x1xf32>
    %136 = vector.broadcast %128 : vector<8x1xf32> to vector<8x32xf32>
    %137 = arith.subf %124, %136 : vector<8x32xf32>
    %cst_33 = arith.constant 9.99999974E-6 : f32
    %138 = vector.broadcast %cst_33 : f32 to vector<8x1xf32>
    %139 = arith.addf %135, %138 : vector<8x1xf32>
    %140 = math.rsqrt %139 : vector<8x1xf32>
    %141 = vector.broadcast %140 : vector<8x1xf32> to vector<8x32xf32>
    %142 = vector.broadcast %87 : vector<1x32xf32> to vector<8x32xf32>
    %143 = arith.mulf %141, %142 : vector<8x32xf32>
    %144 = arith.mulf %137, %143 : vector<8x32xf32>
    %145 = vector.broadcast %88 : vector<1x32xf32> to vector<8x32xf32>
    %146 = arith.addf %144, %145 : vector<8x32xf32>
    %147 = math.tanh %146 : vector<8x32xf32>
    %148 = arith.mulf %121, %147 : vector<8x32xf32>
    %149 = vector.extract_strided_slice %14 {offsets = [0, 256], sizes = [8, 128], strides = [1, 1]} : vector<8x384xf32> to vector<8x128xf32>
    %150 = arith.truncf %148 : vector<8x32xf32> to vector<8x32xbf16>
    %c32 = arith.constant 32 : index
    %c0_34 = arith.constant 0 : index
    %151 = vector.load %arg4[%c32, %c0_34] : memref<96x128xbf16, #tpu.memory_space<vmem>>, vector<32x128xbf16>
    %cst_35 = arith.constant dense<0.000000e+00> : vector<8x128xf32>
    %152 = tpu.matmul %150, %151, %cst_35 {dimension_numbers = #tpu.dot_dimension_numbers<[1], [0], [0], [1], [0, 0, 1, 1], [], []>} : vector<8x32xbf16>, vector<32x128xbf16>, vector<8x128xf32> -> vector<8x128xf32>
    %153 = arith.addf %149, %152 : vector<8x128xf32>
    %154 = vector.extract_strided_slice %9 {offsets = [4, 0], sizes = [1, 128], strides = [1, 1]} : vector<16x128xf32> to vector<1x128xf32>
    %155 = vector.extract_strided_slice %9 {offsets = [5, 0], sizes = [1, 128], strides = [1, 1]} : vector<16x128xf32> to vector<1x128xf32>
    %156 = vector.extract_strided_slice %9 {offsets = [10, 0], sizes = [1, 32], strides = [1, 1]} : vector<16x128xf32> to vector<1x32xf32>
    %157 = vector.extract_strided_slice %9 {offsets = [11, 0], sizes = [1, 32], strides = [1, 1]} : vector<16x128xf32> to vector<1x32xf32>
    %cst_36 = arith.constant dense<0.000000e+00> : vector<8xf32>
    %158 = vector.multi_reduction <add>, %153, %cst_36 [1] : vector<8x128xf32> to vector<8xf32>
    %159 = vector.shape_cast %158 : vector<8xf32> to vector<8x1xf32>
    %cst_37 = arith.constant 1.280000e+02 : f32
    %160 = vector.broadcast %cst_37 : f32 to vector<8x1xf32>
    %161 = arith.divf %159, %160 : vector<8x1xf32>
    %162 = vector.broadcast %161 : vector<8x1xf32> to vector<8x128xf32>
    %163 = arith.subf %153, %162 : vector<8x128xf32>
    %164 = arith.mulf %163, %163 : vector<8x128xf32>
    %cst_38 = arith.constant dense<0.000000e+00> : vector<8xf32>
    %165 = vector.multi_reduction <add>, %164, %cst_38 [1] : vector<8x128xf32> to vector<8xf32>
    %166 = vector.shape_cast %165 : vector<8xf32> to vector<8x1xf32>
    %cst_39 = arith.constant 1.280000e+02 : f32
    %167 = vector.broadcast %cst_39 : f32 to vector<8x1xf32>
    %168 = arith.divf %166, %167 : vector<8x1xf32>
    %169 = vector.broadcast %161 : vector<8x1xf32> to vector<8x128xf32>
    %170 = arith.subf %153, %169 : vector<8x128xf32>
    %cst_40 = arith.constant 9.99999974E-6 : f32
    %171 = vector.broadcast %cst_40 : f32 to vector<8x1xf32>
    %172 = arith.addf %168, %171 : vector<8x1xf32>
    %173 = math.rsqrt %172 : vector<8x1xf32>
    %174 = vector.broadcast %173 : vector<8x1xf32> to vector<8x128xf32>
    %175 = vector.broadcast %154 : vector<1x128xf32> to vector<8x128xf32>
    %176 = arith.mulf %174, %175 : vector<8x128xf32>
    %177 = arith.mulf %170, %176 : vector<8x128xf32>
    %178 = vector.broadcast %155 : vector<1x128xf32> to vector<8x128xf32>
    %179 = arith.addf %177, %178 : vector<8x128xf32>
    %180 = vector.extract_strided_slice %179 {offsets = [0, 0], sizes = [8, 96], strides = [1, 1]} : vector<8x128xf32> to vector<8x96xf32>
    %181 = arith.negf %180 : vector<8x96xf32>
    %182 = math.exp %181 : vector<8x96xf32>
    %cst_41 = arith.constant 1.000000e+00 : f32
    %183 = vector.broadcast %cst_41 : f32 to vector<8x96xf32>
    %184 = arith.addf %183, %182 : vector<8x96xf32>
    %185 = arith.divf %183, %184 : vector<8x96xf32>
    %186 = vector.extract_strided_slice %179 {offsets = [0, 96], sizes = [8, 32], strides = [1, 1]} : vector<8x128xf32> to vector<8x32xf32>
    %187 = math.tanh %186 : vector<8x32xf32>
    %188 = vector.extract_strided_slice %185 {offsets = [0, 0], sizes = [8, 32], strides = [1, 1]} : vector<8x96xf32> to vector<8x32xf32>
    %189 = vector.extract_strided_slice %185 {offsets = [0, 32], sizes = [8, 32], strides = [1, 1]} : vector<8x96xf32> to vector<8x32xf32>
    %190 = vector.extract_strided_slice %185 {offsets = [0, 64], sizes = [8, 32], strides = [1, 1]} : vector<8x96xf32> to vector<8x32xf32>
    %191 = arith.mulf %189, %8 : vector<8x32xf32>
    %192 = arith.mulf %188, %187 : vector<8x32xf32>
    %193 = arith.addf %191, %192 : vector<8x32xf32>
    %cst_42 = arith.constant dense<0.000000e+00> : vector<8xf32>
    %194 = vector.multi_reduction <add>, %193, %cst_42 [1] : vector<8x32xf32> to vector<8xf32>
    %195 = vector.shape_cast %194 : vector<8xf32> to vector<8x1xf32>
    %cst_43 = arith.constant 3.200000e+01 : f32
    %196 = vector.broadcast %cst_43 : f32 to vector<8x1xf32>
    %197 = arith.divf %195, %196 : vector<8x1xf32>
    %198 = vector.broadcast %197 : vector<8x1xf32> to vector<8x32xf32>
    %199 = arith.subf %193, %198 : vector<8x32xf32>
    %200 = arith.mulf %199, %199 : vector<8x32xf32>
    %cst_44 = arith.constant dense<0.000000e+00> : vector<8xf32>
    %201 = vector.multi_reduction <add>, %200, %cst_44 [1] : vector<8x32xf32> to vector<8xf32>
    %202 = vector.shape_cast %201 : vector<8xf32> to vector<8x1xf32>
    %cst_45 = arith.constant 3.200000e+01 : f32
    %203 = vector.broadcast %cst_45 : f32 to vector<8x1xf32>
    %204 = arith.divf %202, %203 : vector<8x1xf32>
    %205 = vector.broadcast %197 : vector<8x1xf32> to vector<8x32xf32>
    %206 = arith.subf %193, %205 : vector<8x32xf32>
    %cst_46 = arith.constant 9.99999974E-6 : f32
    %207 = vector.broadcast %cst_46 : f32 to vector<8x1xf32>
    %208 = arith.addf %204, %207 : vector<8x1xf32>
    %209 = math.rsqrt %208 : vector<8x1xf32>
    %210 = vector.broadcast %209 : vector<8x1xf32> to vector<8x32xf32>
    %211 = vector.broadcast %156 : vector<1x32xf32> to vector<8x32xf32>
    %212 = arith.mulf %210, %211 : vector<8x32xf32>
    %213 = arith.mulf %206, %212 : vector<8x32xf32>
    %214 = vector.broadcast %157 : vector<1x32xf32> to vector<8x32xf32>
    %215 = arith.addf %213, %214 : vector<8x32xf32>
    %216 = math.tanh %215 : vector<8x32xf32>
    %217 = arith.mulf %190, %216 : vector<8x32xf32>
    %218 = arith.truncf %217 : vector<8x32xf32> to vector<8x32xbf16>
    %c64 = arith.constant 64 : index
    %c0_47 = arith.constant 0 : index
    %219 = vector.load %arg4[%c64, %c0_47] : memref<96x128xbf16, #tpu.memory_space<vmem>>, vector<32x128xbf16>
    %cst_48 = arith.constant dense<0.000000e+00> : vector<8x128xf32>
    %220 = tpu.matmul %218, %219, %cst_48 {dimension_numbers = #tpu.dot_dimension_numbers<[1], [0], [0], [1], [0, 0, 1, 1], [], []>} : vector<8x32xbf16>, vector<32x128xbf16>, vector<8x128xf32> -> vector<8x128xf32>
    %221 = vector.extract_strided_slice %9 {offsets = [12, 0], sizes = [1, 128], strides = [1, 1]} : vector<16x128xf32> to vector<1x128xf32>
    %222 = vector.broadcast %221 : vector<1x128xf32> to vector<8x128xf32>
    %223 = arith.addf %220, %222 : vector<8x128xf32>
    %cst_49 = arith.constant 0.000000e+00 : f32
    %224 = vector.broadcast %cst_49 : f32 to vector<8x32xf32>
    %225 = tpu.concatenate %79, %148, %217, %224, %55, %124, %193, %224 in 1 : vector<8x32xf32>, vector<8x32xf32>, vector<8x32xf32>, vector<8x32xf32>, vector<8x32xf32>, vector<8x32xf32>, vector<8x32xf32>, vector<8x32xf32> -> vector<8x256xf32>
    %c0_50 = arith.constant 0 : index
    %c0_51 = arith.constant 0 : index
    %226 = vector.load %arg7[%c0_50, %c0_51] : memref<8x256xf32, #tpu.memory_space<vmem>>, vector<8x256xf32>
    tpu.vector_store %arg7[%c0_50, %c0_51], %225 {strides = array<i32>} : memref<8x256xf32, #tpu.memory_space<vmem>>, vector<8x256xf32>,
    %227 = tpu.concatenate %223, %225 in 1 : vector<8x128xf32>, vector<8x256xf32> -> vector<8x384xf32>
    %c0_52 = arith.constant 0 : index
    %c0_53 = arith.constant 0 : index
    %c0_54 = arith.constant 0 : index
    %228 = vector.load %arg6[%c0_52, %c0_53, %c0_54] : memref<1x8x384xf32, #tpu.memory_space<vmem>>, vector<1x8x384xf32>
    %229 = vector.shape_cast %228 : vector<1x8x384xf32> to vector<8x384xf32>
    %230 = vector.shape_cast %227 : vector<8x384xf32> to vector<1x8x384xf32>
    tpu.vector_store %arg6[%c0_52, %c0_53, %c0_54], %230 {strides = array<i32>} : memref<1x8x384xf32, #tpu.memory_space<vmem>>, vector<1x8x384xf32>,
    return
  }
  func.func @transform_0(%arg0: i32) -> (i32, i32, i32) {
    %c0_i32 = arith.constant 0 : i32
    %c0_i32_0 = arith.constant 0 : i32
    %c0_i32_1 = arith.constant 0 : i32
    return %arg0, %c0_i32, %c0_i32_0 : i32, i32, i32
  }
  func.func @transform_1(%arg0: i32) -> (i32, i32) {
    %c0_i32 = arith.constant 0 : i32
    %c0_i32_0 = arith.constant 0 : i32
    %c0_i32_1 = arith.constant 0 : i32
    return %c0_i32, %c0_i32_0 : i32, i32
  }
  func.func @transform_2(%arg0: i32) -> (i32, i32) {
    %c0_i32 = arith.constant 0 : i32
    %c0_i32_0 = arith.constant 0 : i32
    %c0_i32_1 = arith.constant 0 : i32
    return %c0_i32, %c0_i32_0 : i32, i32
  }
  func.func @transform_3(%arg0: i32) -> (i32, i32) {
    %c0_i32 = arith.constant 0 : i32
    %c0_i32_0 = arith.constant 0 : i32
    %c0_i32_1 = arith.constant 0 : i32
    return %c0_i32, %c0_i32_0 : i32, i32
  }
  func.func @transform_4(%arg0: i32) -> (i32, i32) {
    %c0_i32 = arith.constant 0 : i32
    %c0_i32_0 = arith.constant 0 : i32
    %c0_i32_1 = arith.constant 0 : i32
    return %c0_i32, %c0_i32_0 : i32, i32
  }
  func.func @transform_5(%arg0: i32) -> (i32, i32, i32) {
    %c0_i32 = arith.constant 0 : i32
    %c0_i32_0 = arith.constant 0 : i32
    %c0_i32_1 = arith.constant 0 : i32
    return %arg0, %c0_i32, %c0_i32_0 : i32, i32, i32
  }
}

</mosaic_0001>

<llo_original>
// kernel: tpu_custom_call.1
$region0: #{tpu_custom_call.1}
  #allocation0 [shape = 'u32[]', space=smem, size = 0x4, offset = 0x4, fixed_abs, tag = 'smem constant byte address 0x4 - core index']
  #allocation1 [shape = 'u32[72,128]{1,0:T(1,128)}', space=vmem, size = 0x9000, scoped, tag = 'internal scratch']
  #allocation2 [shape = 'f32[8,256]{1,0:T(8,128)}', space=vmem, size = 0x2000, scoped, tag = 'scratch operand']
  %s0 = inlined_call_operand.hbm [shape: f32[1,8,384], index: 0, kind: input, shape index: {}]
  %s1 = inlined_call_operand.hbm [shape: f32[8,256], index: 1, kind: input, shape index: {}]
  %s2 = inlined_call_operand.hbm [shape: bf16[128,384], index: 2, kind: input, shape index: {}]
  %s3 = inlined_call_operand.hbm [shape: bf16[96,128], index: 3, kind: input, shape index: {}]
  %s4 = inlined_call_operand.hbm [shape: f32[16,128], index: 4, kind: input, shape index: {}]
  %s5 = inlined_call_operand.hbm [shape: f32[1,8,384], index: 5, kind: output, shape index: {}]
  %s6 = sld [smem:[#allocation0]]
  $region54: #{tpu_custom_call.1} parent=0
    _
  %s8 = ssub.s32 1, %s6
  %s9 = scalar_select 0, %s8, %s6
  $region1: #{tpu_custom_call.1} parent=0
    #allocation3 [shape = 'u8[12288]{0}', space=vmem, size = 0x3000, scoped, tag = 'input window, operand 0, single buffered']
    #allocation4 [shape = 's32[1]{0}', space=sflag, size = 0x4, scoped, tag = 'scoped memory for tpu_custom_call.1']
    #allocation5 [shape = 's32[1]{0}', space=sflag, size = 0x4, scoped, tag = 'scoped memory for tpu_custom_call.1']
    #allocation6 [shape = 'u8[8192]{0}', space=vmem, size = 0x2000, scoped, tag = 'input window, operand 1, single buffered']
    #allocation7 [shape = 's32[1]{0}', space=sflag, size = 0x4, scoped, tag = 'scoped memory for tpu_custom_call.1']
    #allocation8 [shape = 'u8[98304]{0}', space=vmem, size = 0x18000, scoped, tag = 'input window, operand 2, single buffered']
    #allocation9 [shape = 'u8[24576]{0}', space=vmem, size = 0x6000, scoped, tag = 'input window, operand 3, single buffered']
    #allocation10 [shape = 's32[1]{0}', space=sflag, size = 0x4, scoped, tag = 'scoped memory for tpu_custom_call.1']
    #allocation11 [shape = 'u8[8192]{0}', space=vmem, size = 0x2000, scoped, tag = 'input window, operand 4, single buffered']
    #allocation12 [shape = 'u8[12288]{0}', space=vmem, size = 0x3000, scoped, tag = 'output window, operand 0, single buffered']
    %10 = vsyncpa [#allocation4], 0
    %11 = vsyncpa [#allocation7], 0
    %12 = vsyncpa [#allocation10], 0
    %13 = vsyncpa [#allocation5], 0
    // Predicated region
    $region2: #{tpu_custom_call.1} parent=1 // pred_check
      _
    $region3: #{tpu_custom_call.1} parent=1 // pred_check_branch
      %15 = sbr.rel (0) target = $region5
    $region4: #{tpu_custom_call.1} parent=1 // pred_region
      %17 = vsyncadd [#allocation4], 0
      %s19 = sshll.u32 %s0, 4
      %s20 = int_to_ptr.hbm [resolvable:$true] %s19
      %s21 = sshll.u32 [#allocation3], 4
      %s22 = int_to_ptr.vmem [resolvable:$true] %s21
      %24 = dma.hbm_to_vmem [thread:$0]  %s20, 384, %s22, [#allocation4]
    $region5: #{tpu_custom_call.1} parent=1 // pred_fallthru
      _
    // Predicated region
    $region6: #{tpu_custom_call.1} parent=1 // pred_check
      _
    $region7: #{tpu_custom_call.1} parent=1 // pred_check_branch
      %26 = sbr.rel (0) target = $region9
    $region8: #{tpu_custom_call.1} parent=1 // pred_region
      %28 = vsyncadd [#allocation7], 0
      %s30 = sshll.u32 %s1, 4
      %s31 = int_to_ptr.hbm [resolvable:$true] %s30
      %s32 = sshll.u32 [#allocation6], 4
      %s33 = int_to_ptr.vmem [resolvable:$true] %s32
      %35 = dma.hbm_to_vmem [thread:$0]  %s31, 256, %s33, [#allocation7]
    $region9: #{tpu_custom_call.1} parent=1 // pred_fallthru
      _
    // Predicated region
    $region10: #{tpu_custom_call.1} parent=1 // pred_check
      _
    $region11: #{tpu_custom_call.1} parent=1 // pred_check_branch
      %37 = sbr.rel (0) target = $region13
    $region12: #{tpu_custom_call.1} parent=1 // pred_region
      %39 = vsyncadd [#allocation7], 0
      %s40 = sshll.u32 %s2, 4
      %s41 = int_to_ptr.hbm [resolvable:$true] %s40
      %s42 = sshll.u32 [#allocation8], 4
      %s43 = int_to_ptr.vmem [resolvable:$true] %s42
      %48 = dma.hbm_to_vmem [thread:$0]  %s41, 3072, %s43, [#allocation7], 192, 192, 12
    $region13: #{tpu_custom_call.1} parent=1 // pred_fallthru
      _
    // Predicated region
    $region14: #{tpu_custom_call.1} parent=1 // pred_check
      _
    $region15: #{tpu_custom_call.1} parent=1 // pred_check_branch
      %50 = sbr.rel (0) target = $region17
    $region16: #{tpu_custom_call.1} parent=1 // pred_region
      %52 = vsyncadd [#allocation10], 0
      %s53 = sshll.u32 %s3, 4
      %s54 = int_to_ptr.hbm [resolvable:$true] %s53
      %s55 = sshll.u32 [#allocation9], 4
      %s56 = int_to_ptr.vmem [resolvable:$true] %s55
      %61 = dma.hbm_to_vmem [thread:$0]  %s54, 768, %s56, [#allocation10], 64, 64, 4
    $region17: #{tpu_custom_call.1} parent=1 // pred_fallthru
      _
    // Predicated region
    $region18: #{tpu_custom_call.1} parent=1 // pred_check
      _
    $region19: #{tpu_custom_call.1} parent=1 // pred_check_branch
      %63 = sbr.rel (0) target = $region21
    $region20: #{tpu_custom_call.1} parent=1 // pred_region
      %65 = vsyncadd [#allocation10], 0
      %s66 = sshll.u32 %s4, 4
      %s67 = int_to_ptr.hbm [resolvable:$true] %s66
      %s68 = sshll.u32 [#allocation11], 4
      %s69 = int_to_ptr.vmem [resolvable:$true] %s68
      %74 = dma.hbm_to_vmem [thread:$0]  %s67, 256, %s69, [#allocation10], 128, 128, 8
    $region21: #{tpu_custom_call.1} parent=1 // pred_fallthru
      _
    // Predicated region
    $region22: #{tpu_custom_call.1} parent=1 // pred_check
      _
    $region23: #{tpu_custom_call.1} parent=1 // pred_check_branch
      %76 = sbr.rel (0) target = $region25
    $region24: #{tpu_custom_call.1} parent=1 // pred_region
      %78 = dma.done [#allocation4], 384
    $region25: #{tpu_custom_call.1} parent=1 // pred_fallthru
      _
    // Predicated region
    $region26: #{tpu_custom_call.1} parent=1 // pred_check
      _
    $region27: #{tpu_custom_call.1} parent=1 // pred_check_branch
      %80 = sbr.rel (0) target = $region29
    $region28: #{tpu_custom_call.1} parent=1 // pred_region
      %82 = dma.done [#allocation7], 256
    $region29: #{tpu_custom_call.1} parent=1 // pred_fallthru
      _
    // Predicated region
    $region30: #{tpu_custom_call.1} parent=1 // pred_check
      _
    $region31: #{tpu_custom_call.1} parent=1 // pred_check_branch
      %84 = sbr.rel (0) target = $region33
    $region32: #{tpu_custom_call.1} parent=1 // pred_region
      %86 = dma.done [#allocation7], 3072
    $region33: #{tpu_custom_call.1} parent=1 // pred_fallthru
      _
    // Predicated region
    $region34: #{tpu_custom_call.1} parent=1 // pred_check
      _
    $region35: #{tpu_custom_call.1} parent=1 // pred_check_branch
      %88 = sbr.rel (0) target = $region37
    $region36: #{tpu_custom_call.1} parent=1 // pred_region
      %90 = dma.done [#allocation10], 768
    $region37: #{tpu_custom_call.1} parent=1 // pred_fallthru
      _
    // Predicated region
    $region38: #{tpu_custom_call.1} parent=1 // pred_check
      _
    $region39: #{tpu_custom_call.1} parent=1 // pred_check_branch
      %92 = sbr.rel (0) target = $region41
    $region40: #{tpu_custom_call.1} parent=1 // pred_region
      %94 = dma.done [#allocation10], 256
    $region41: #{tpu_custom_call.1} parent=1 // pred_fallthru
      _
    %p96 = scmp.eq.s32.totalorder 0, 0
    // Predicated region
    $region42: #{tpu_custom_call.1} parent=1 // pred_check
      %p97 = pneg %p96
    $region43: #{tpu_custom_call.1} parent=1 // pred_check_branch
      %99 = sbr.rel (%p97) target = $region45
    $region44: #{tpu_custom_call.1} parent=1 // pred_region
      %v100 = vld [vmem:[#allocation6] sm:$0xff]
      %v101 = vld [vmem:[#allocation6 + $0x8] sm:$0xff]
      %102 = vst [vmem:[#allocation2] sm:$0xff] %v100
      %103 = vst [vmem:[#allocation2 + $0x8] sm:$0xff] %v101
    $region45: #{tpu_custom_call.1} parent=1 // pred_fallthru
      _
    %v104 = vld [vmem:[#allocation2] sm:$0xff]
    %v105 = vld [vmem:[#allocation2 + $0x8] sm:$0xff]
    %v106 = vpack.c.bf16 %v104, %v104
    %v107 = vld [vmem:[#allocation11] sm:$0xff]
    %v108 = vld [vmem:[#allocation11 + $0x8] sm:$0xff]
    %v109 = vld [vmem:[#allocation3] sm:$0xff]
    %v110 = vld [vmem:[#allocation3 + $0x8] sm:$0xff]
    %v111 = vld [vmem:[#allocation3 + $0x10] sm:$0xff]
    %v112 = vld [vmem:[#allocation8] sm:$0xff]
    %v113 = vld [vmem:[#allocation8 + $0x8] sm:$0xf]
    %v114 = vld [vmem:[#allocation8 + $0xc] sm:$0xff]
    %v115 = vld [vmem:[#allocation8 + $0x14] sm:$0xf]
    %v116 = vld [vmem:[#allocation8 + $0x18] sm:$0xff]
    %v117 = vld [vmem:[#allocation8 + $0x20] sm:$0xf]
    %v118 = vld [vmem:[#allocation8 + $0x24] sm:$0xff]
    %v119 = vld [vmem:[#allocation8 + $0x2c] sm:$0xf]
    %v120 = vld [vmem:[#allocation8 + $0x30] sm:$0xff]
    %v121 = vld [vmem:[#allocation8 + $0x38] sm:$0xf]
    %v122 = vld [vmem:[#allocation8 + $0x3c] sm:$0xff]
    %v123 = vld [vmem:[#allocation8 + $0x44] sm:$0xf]
    %v124 = vld [vmem:[#allocation8 + $0x48] sm:$0xff]
    %v125 = vld [vmem:[#allocation8 + $0x50] sm:$0xf]
    %v126 = vld [vmem:[#allocation8 + $0x54] sm:$0xff]
    %v127 = vld [vmem:[#allocation8 + $0x5c] sm:$0xf]
    %v128 = vld [vmem:[#allocation8 + $0x60] sm:$0xff]
    %v129 = vld [vmem:[#allocation8 + $0x68] sm:$0xf]
    %v130 = vld [vmem:[#allocation8 + $0x6c] sm:$0xff]
    %v131 = vld [vmem:[#allocation8 + $0x74] sm:$0xf]
    %v132 = vld [vmem:[#allocation8 + $0x78] sm:$0xff]
    %v133 = vld [vmem:[#allocation8 + $0x80] sm:$0xf]
    %v134 = vld [vmem:[#allocation8 + $0x84] sm:$0xff]
    %v135 = vld [vmem:[#allocation8 + $0x8c] sm:$0xf]
    %v136 = vld [vmem:[#allocation8 + $0x90] sm:$0xff]
    %v137 = vld [vmem:[#allocation8 + $0x98] sm:$0xf]
    %v138 = vld [vmem:[#allocation8 + $0x9c] sm:$0xff]
    %v139 = vld [vmem:[#allocation8 + $0xa4] sm:$0xf]
    %v140 = vld [vmem:[#allocation8 + $0xa8] sm:$0xff]
    %v141 = vld [vmem:[#allocation8 + $0xb0] sm:$0xf]
    %v142 = vld [vmem:[#allocation8 + $0xb4] sm:$0xff]
    %v143 = vld [vmem:[#allocation8 + $0xbc] sm:$0xf]
    %v176 = vunpack.c.l.b16 %v112
    %v177 = vunpack.c.h.b16 %v112
    %v178 = vunpack.c.l.b16 %v113
    %v179 = vunpack.c.l.b16 %v114
    %v180 = vunpack.c.h.b16 %v114
    %v181 = vunpack.c.l.b16 %v115
    %v182 = vunpack.c.l.b16 %v116
    %v183 = vunpack.c.h.b16 %v116
    %v184 = vunpack.c.l.b16 %v117
    %v185 = vunpack.c.l.b16 %v118
    %v186 = vunpack.c.h.b16 %v118
    %v187 = vunpack.c.l.b16 %v119
    %v188 = vunpack.c.l.b16 %v120
    %v189 = vunpack.c.h.b16 %v120
    %v190 = vunpack.c.l.b16 %v121
    %v191 = vunpack.c.l.b16 %v122
    %v192 = vunpack.c.h.b16 %v122
    %v193 = vunpack.c.l.b16 %v123
    %v194 = vunpack.c.l.b16 %v124
    %v195 = vunpack.c.h.b16 %v124
    %v196 = vunpack.c.l.b16 %v125
    %v197 = vunpack.c.l.b16 %v126
    %v198 = vunpack.c.h.b16 %v126
    %v199 = vunpack.c.l.b16 %v127
    %v200 = vunpack.c.l.b16 %v128
    %v201 = vunpack.c.h.b16 %v128
    %v202 = vunpack.c.l.b16 %v129
    %v203 = vunpack.c.l.b16 %v130
    %v204 = vunpack.c.h.b16 %v130
    %v205 = vunpack.c.l.b16 %v131
    %v206 = vunpack.c.l.b16 %v132
    %v207 = vunpack.c.h.b16 %v132
    %v208 = vunpack.c.l.b16 %v133
    %v209 = vunpack.c.l.b16 %v134
    %v210 = vunpack.c.h.b16 %v134
    %v211 = vunpack.c.l.b16 %v135
    %v212 = vunpack.c.l.b16 %v136
    %v213 = vunpack.c.h.b16 %v136
    %v214 = vunpack.c.l.b16 %v137
    %v215 = vunpack.c.l.b16 %v138
    %v216 = vunpack.c.h.b16 %v138
    %v217 = vunpack.c.l.b16 %v139
    %v218 = vunpack.c.l.b16 %v140
    %v219 = vunpack.c.h.b16 %v140
    %v220 = vunpack.c.l.b16 %v141
    %v221 = vunpack.c.l.b16 %v142
    %v222 = vunpack.c.h.b16 %v142
    %v223 = vunpack.c.l.b16 %v143
    %v224 = vpack.c.b16 %v179, %v176
    %v225 = vpack.c.b16 %v180, %v177
    %v226 = vpack.c.b16 %v181, %v178
    %v227 = vpack.c.b16 %v185, %v182
    %v228 = vpack.c.b16 %v186, %v183
    %v229 = vpack.c.b16 %v187, %v184
    %v230 = vpack.c.b16 %v191, %v188
    %v231 = vpack.c.b16 %v192, %v189
    %v232 = vpack.c.b16 %v193, %v190
    %v233 = vpack.c.b16 %v197, %v194
    %v234 = vpack.c.b16 %v198, %v195
    %v235 = vpack.c.b16 %v199, %v196
    %v236 = vpack.c.b16 %v203, %v200
    %v237 = vpack.c.b16 %v204, %v201
    %v238 = vpack.c.b16 %v205, %v202
    %v239 = vpack.c.b16 %v209, %v206
    %v240 = vpack.c.b16 %v210, %v207
    %v241 = vpack.c.b16 %v211, %v208
    %v242 = vpack.c.b16 %v215, %v212
    %v243 = vpack.c.b16 %v216, %v213
    %v244 = vpack.c.b16 %v217, %v214
    %v245 = vpack.c.b16 %v221, %v218
    %v246 = vpack.c.b16 %v222, %v219
    %v247 = vpack.c.b16 %v223, %v220
    %272 = vmatpush.bf16.msra.mxu0 %v245
    %273 = vmatpush.bf16.msra.mxu0 %v242
    %274 = vmatpush.bf16.msra.mxu0 %v239
    %275 = vmatpush.bf16.msra.mxu0 %v236
    %276 = vmatpush.bf16.msra.mxu0 %v233
    %277 = vmatpush.bf16.msra.mxu0 %v230
    %278 = vmatpush.bf16.msra.mxu0 %v227
    %279 = vmatpush.bf16.msra.mxu0 %v224
    %280 = vmatmul.bf16.gmra.mxu0 %v106
    %v281 = vpop.f32.mrf.mxu0
    %v282 = vadd.f32 0.0, %v281
    %v283 = vpop.f32.mrf.mxu0
    %284 = vdwg.mxu0
    %285 = vmatpush.bf16.msra.mxu0 %v246
    %286 = vmatpush.bf16.msra.mxu0 %v243
    %287 = vmatpush.bf16.msra.mxu0 %v240
    %288 = vmatpush.bf16.msra.mxu0 %v237
    %289 = vmatpush.bf16.msra.mxu0 %v234
    %290 = vmatpush.bf16.msra.mxu0 %v231
    %291 = vmatpush.bf16.msra.mxu0 %v228
    %292 = vmatpush.bf16.msra.mxu0 %v225
    %293 = vmatmul.bf16.gmra.mxu0 %v106
    %v294 = vpop.f32.mrf.mxu0
    %v295 = vadd.f32 0.0, %v294
    %v296 = vpop.f32.mrf.mxu0
    %297 = vdwg.mxu0
    %298 = vmatpush.bf16.msra.mxu0 %v247
    %299 = vmatpush.bf16.msra.mxu0 %v244
    %300 = vmatpush.bf16.msra.mxu0 %v241
    %301 = vmatpush.bf16.msra.mxu0 %v238
    %302 = vmatpush.bf16.msra.mxu0 %v235
    %303 = vmatpush.bf16.msra.mxu0 %v232
    %304 = vmatpush.bf16.msra.mxu0 %v229
    %305 = vmatpush.bf16.msra.mxu0 %v226
    %306 = vmatmul.bf16.gmra.mxu0 %v106
    %v307 = vpop.f32.mrf.mxu0
    %v308 = vadd.f32 0.0, %v307
    %v309 = vpop.f32.mrf.mxu0
    %310 = vdwg.mxu0
    %v311 = vadd.f32 %v109, %v282
    %v312 = vadd.f32 %v110, %v295
    %v313 = vadd.f32 %v111, %v308
    %314 = vadd.xlane.f32.xlu0 %v311
    %v315 = vpop.xlane.xlu0 %314
    %v316 = vrcp.pop 128.0
    %v317 = vmul.f32 128.0, %v316
    %v318 = vsub.f32 1.0, %v317
    %v319 = vmul.f32 %v316, %v318
    %v320 = vadd.f32 %v316, %v319
    %vm321 = vweird.f32 %v316
    %v322 = vsel %vm321, %v316, %v320
    %v323 = vmul.f32 %v315, %v322
    %v324 = vsub.f32 %v311, %v323
    %v325 = vmul.f32 %v324, %v324
    %326 = vadd.xlane.f32.xlu0 %v325
    %v327 = vpop.xlane.xlu0 %326
    %v328 = vmul.f32 %v327, %v322
    %v329 = vadd.f32 %v328, 1e-05
    %v330 = vrsqrt.pop %v329
    %v331 = vmul.f32 %v330, %v329
    %v332 = vmul.f32 %v331, %v330
    %v333 = vmul.f32 0.5, %v332
    %v334 = vsub.f32 1.5, %v333
    %v335 = vmul.f32 %v330, %v334
    %vm336 = vweird.f32 %v329
    %vm337 = vweird.f32 %v330
    %vm338 = vmor %vm336, %vm337
    %v339 = vsel %vm338, %v330, %v335
    %v340 = vperm.slane %v107, 0
    %v341 = vmul.f32 %v339, %v340
    %v342 = vmul.f32 %v324, %v341
    %v343 = vperm.slane %v107, 1
    %v344 = vadd.f32 %v342, %v343
    %v345 = vxor.u32 %v344, 2147483648
    %v346 = vmul.f32 %v345, 1.442695
    %v347 = vpow.pop %v346
    %v348 = vadd.f32 %v347, 1.0
    %v349 = vrcp.pop %v348
    %v350 = vmul.f32 %v348, %v349
    %v351 = vsub.f32 1.0, %v350
    %v352 = vmul.f32 %v349, %v351
    %v353 = vadd.f32 %v349, %v352
    %vm354 = vweird.f32 %v348
    %vm355 = vweird.f32 %v349
    %vm356 = vmor %vm354, %vm355
    %v357 = vsel %vm356, %v349, %v353
    %v358 = vand.u32 2147483647, %v348
    %vm359 = vcmp.eq.f32.partialorder %v358, 8.507059e+37
    %v360 = vand.u32 %v348, 2147483648
    %v361 = vor.u32 1.1754944e-38, %v360
    %v362 = vsel %vm359, %v361, %v357
    %v363 = vmul.f32 1.0, %v362
    %v364 = vtanh.pop %v344
    %366 = vrot.lane.b32.xlu0 %v105, 32
    %v367 = vpop.permute.xlu0 %366
    %v369 = vmul.f32 %v363, %v367
    %371 = vrot.lane.b32.xlu0 %v364, 32
    %v372 = vpop.permute.xlu0 %371
    %v374 = vmul.f32 %v363, %v372
    %376 = vrot.lane.b32.xlu0 %v374, 32
    %v377 = vpop.permute.xlu0 %376
    %v379 = vadd.f32 %v369, %v377
    %381 = vrot.lane.b32.xlu0 %v379, 96
    %v382 = vpop.permute.xlu0 %381
    %vm384 = vcmask 261120
    %v385 = vsel %vm384, %v382, 0.0
    %386 = vadd.xlane.f32.xlu0 %v385
    %v387 = vpop.xlane.xlu0 %386
    %v388 = vrcp.pop 32.0
    %v389 = vmul.f32 32.0, %v388
    %v390 = vsub.f32 1.0, %v389
    %v391 = vmul.f32 %v388, %v390
    %v392 = vadd.f32 %v388, %v391
    %vm393 = vweird.f32 %v388
    %v394 = vsel %vm393, %v388, %v392
    %v395 = vmul.f32 %v387, %v394
    %v396 = vsub.f32 %v379, %v395
    %v397 = vmul.f32 %v396, %v396
    %399 = vrot.lane.b32.xlu0 %v397, 96
    %v400 = vpop.permute.xlu0 %399
    %v402 = vsel %vm384, %v400, 0.0
    %403 = vadd.xlane.f32.xlu0 %v402
    %v404 = vpop.xlane.xlu0 %403
    %v405 = vmul.f32 %v404, %v394
    %v406 = vadd.f32 %v405, 1e-05
    %v407 = vrsqrt.pop %v406
    %v408 = vmul.f32 %v407, %v406
    %v409 = vmul.f32 %v408, %v407
    %v410 = vmul.f32 0.5, %v409
    %v411 = vsub.f32 1.5, %v410
    %v412 = vmul.f32 %v407, %v411
    %vm413 = vweird.f32 %v406
    %vm414 = vweird.f32 %v407
    %vm415 = vmor %vm413, %vm414
    %v416 = vsel %vm415, %v407, %v412
    %v417 = vperm.slane %v107, 6
    %v418 = vmul.f32 %v416, %v417
    %420 = vrot.lane.b32.xlu0 %v418, 32
    %v421 = vpop.permute.xlu0 %420
    %v423 = vmul.f32 %v396, %v421
    %v424 = vperm.slane %v107, 7
    %426 = vrot.lane.b32.xlu0 %v424, 32
    %v427 = vpop.permute.xlu0 %426
    %v429 = vadd.f32 %v423, %v427
    %v430 = vtanh.pop %v429
    %432 = vrot.lane.b32.xlu0 %v430, 32
    %v433 = vpop.permute.xlu0 %432
    %v435 = vmul.f32 %v363, %v433
    %v436 = vpack.c.bf16 %v435, %v435
    %v437 = vld [vmem:[#allocation9] sm:$0xf]
    %v438 = vld [vmem:[#allocation9 + $0x4] sm:$0xf]
    %v439 = vld [vmem:[#allocation9 + $0x8] sm:$0xf]
    %v440 = vld [vmem:[#allocation9 + $0xc] sm:$0xf]
    %442 = vrot.lane.b32.xlu0 %v436, 64
    %v443 = vpop.permute.xlu0 %442
    %v448 = vunpack.c.l.b16 %v437
    %v449 = vunpack.c.l.b16 %v438
    %v450 = vunpack.c.l.b16 %v439
    %v451 = vunpack.c.l.b16 %v440
    %v452 = vpack.c.b16 %v449, %v448
    %v453 = vpack.c.b16 %v451, %v450
    %v457 = vsel %vm384, %v443, 0
    %459 = vmatpush.bf16.msra.mxu0 0
    %460 = vmatpush.bf16.msra.mxu0 0
    %461 = vmatpush.bf16.msra.mxu0 0
    %462 = vmatpush.bf16.msra.mxu0 0
    %463 = vmatpush.bf16.msra.mxu0 0
    %464 = vmatpush.bf16.msra.mxu0 0
    %465 = vmatpush.bf16.msra.mxu0 %v453
    %466 = vmatpush.bf16.msra.mxu0 %v452
    %467 = vmatmul.bf16.gmra.mxu0 %v457
    %v468 = vpop.f32.mrf.mxu0
    %v469 = vadd.f32 0.0, %v468
    %v470 = vpop.f32.mrf.mxu0
    %471 = vdwg.mxu0
    %v472 = vadd.f32 %v312, %v469
    %473 = vadd.xlane.f32.xlu0 %v472
    %v474 = vpop.xlane.xlu0 %473
    %v475 = vmul.f32 %v474, %v322
    %v476 = vsub.f32 %v472, %v475
    %v477 = vmul.f32 %v476, %v476
    %478 = vadd.xlane.f32.xlu0 %v477
    %v479 = vpop.xlane.xlu0 %478
    %v480 = vmul.f32 %v479, %v322
    %v481 = vadd.f32 %v480, 1e-05
    %v482 = vrsqrt.pop %v481
    %v483 = vmul.f32 %v482, %v481
    %v484 = vmul.f32 %v483, %v482
    %v485 = vmul.f32 0.5, %v484
    %v486 = vsub.f32 1.5, %v485
    %v487 = vmul.f32 %v482, %v486
    %vm488 = vweird.f32 %v481
    %vm489 = vweird.f32 %v482
    %vm490 = vmor %vm488, %vm489
    %v491 = vsel %vm490, %v482, %v487
    %v492 = vperm.slane %v107, 2
    %v493 = vmul.f32 %v491, %v492
    %v494 = vmul.f32 %v476, %v493
    %v495 = vperm.slane %v107, 3
    %v496 = vadd.f32 %v494, %v495
    %v497 = vxor.u32 %v496, 2147483648
    %v498 = vmul.f32 %v497, 1.442695
    %v499 = vpow.pop %v498
    %v500 = vadd.f32 %v499, 1.0
    %v501 = vrcp.pop %v500
    %v502 = vmul.f32 %v500, %v501
    %v503 = vsub.f32 1.0, %v502
    %v504 = vmul.f32 %v501, %v503
    %v505 = vadd.f32 %v501, %v504
    %vm506 = vweird.f32 %v500
    %vm507 = vweird.f32 %v501
    %vm508 = vmor %vm506, %vm507
    %v509 = vsel %vm508, %v501, %v505
    %v510 = vand.u32 2147483647, %v500
    %vm511 = vcmp.eq.f32.partialorder %v510, 8.507059e+37
    %v512 = vand.u32 %v500, 2147483648
    %v513 = vor.u32 1.1754944e-38, %v512
    %v514 = vsel %vm511, %v513, %v509
    %v515 = vmul.f32 1.0, %v514
    %v516 = vtanh.pop %v496
    %v517 = vmul.f32 %v515, %v105
    %519 = vrot.lane.b32.xlu0 %v516, 32
    %v520 = vpop.permute.xlu0 %519
    %v522 = vmul.f32 %v515, %v520
    %524 = vrot.lane.b32.xlu0 %v522, 32
    %v525 = vpop.permute.xlu0 %524
    %v527 = vadd.f32 %v517, %v525
    %529 = vrot.lane.b32.xlu0 %v527, 96
    %v530 = vpop.permute.xlu0 %529
    %v532 = vsel %vm384, %v530, 0.0
    %533 = vadd.xlane.f32.xlu0 %v532
    %v534 = vpop.xlane.xlu0 %533
    %v535 = vmul.f32 %v534, %v394
    %v536 = vsub.f32 %v527, %v535
    %v537 = vmul.f32 %v536, %v536
    %539 = vrot.lane.b32.xlu0 %v537, 96
    %v540 = vpop.permute.xlu0 %539
    %v542 = vsel %vm384, %v540, 0.0
    %543 = vadd.xlane.f32.xlu0 %v542
    %v544 = vpop.xlane.xlu0 %543
    %v545 = vmul.f32 %v544, %v394
    %v546 = vadd.f32 %v545, 1e-05
    %v547 = vrsqrt.pop %v546
    %v548 = vmul.f32 %v547, %v546
    %v549 = vmul.f32 %v548, %v547
    %v550 = vmul.f32 0.5, %v549
    %v551 = vsub.f32 1.5, %v550
    %v552 = vmul.f32 %v547, %v551
    %vm553 = vweird.f32 %v546
    %vm554 = vweird.f32 %v547
    %vm555 = vmor %vm553, %vm554
    %v556 = vsel %vm555, %v547, %v552
    %v557 = vperm.slane %v108, 0
    %v558 = vmul.f32 %v556, %v557
    %560 = vrot.lane.b32.xlu0 %v558, 32
    %v561 = vpop.permute.xlu0 %560
    %v563 = vmul.f32 %v536, %v561
    %v564 = vperm.slane %v108, 1
    %566 = vrot.lane.b32.xlu0 %v564, 32
    %v567 = vpop.permute.xlu0 %566
    %v569 = vadd.f32 %v563, %v567
    %v570 = vtanh.pop %v569
    %572 = vrot.lane.b32.xlu0 %v570, 32
    %v573 = vpop.permute.xlu0 %572
    %v575 = vmul.f32 %v515, %v573
    %v576 = vpack.c.bf16 %v575, %v575
    %v577 = vld [vmem:[#allocation9 + $0x10] sm:$0xf]
    %v578 = vld [vmem:[#allocation9 + $0x14] sm:$0xf]
    %v579 = vld [vmem:[#allocation9 + $0x18] sm:$0xf]
    %v580 = vld [vmem:[#allocation9 + $0x1c] sm:$0xf]
    %582 = vrot.lane.b32.xlu0 %v576, 64
    %v583 = vpop.permute.xlu0 %582
    %v588 = vunpack.c.l.b16 %v577
    %v589 = vunpack.c.l.b16 %v578
    %v590 = vunpack.c.l.b16 %v579
    %v591 = vunpack.c.l.b16 %v580
    %v592 = vpack.c.b16 %v589, %v588
    %v593 = vpack.c.b16 %v591, %v590
    %v597 = vsel %vm384, %v583, 0
    %599 = vmatpush.bf16.msra.mxu0 0
    %600 = vmatpush.bf16.msra.mxu0 0
    %601 = vmatpush.bf16.msra.mxu0 0
    %602 = vmatpush.bf16.msra.mxu0 0
    %603 = vmatpush.bf16.msra.mxu0 0
    %604 = vmatpush.bf16.msra.mxu0 0
    %605 = vmatpush.bf16.msra.mxu0 %v593
    %606 = vmatpush.bf16.msra.mxu0 %v592
    %607 = vmatmul.bf16.gmra.mxu0 %v597
    %v608 = vpop.f32.mrf.mxu0
    %v609 = vadd.f32 0.0, %v608
    %v610 = vpop.f32.mrf.mxu0
    %611 = vdwg.mxu0
    %v612 = vadd.f32 %v313, %v609
    %613 = vadd.xlane.f32.xlu0 %v612
    %v614 = vpop.xlane.xlu0 %613
    %v615 = vmul.f32 %v614, %v322
    %v616 = vsub.f32 %v612, %v615
    %v617 = vmul.f32 %v616, %v616
    %618 = vadd.xlane.f32.xlu0 %v617
    %v619 = vpop.xlane.xlu0 %618
    %v620 = vmul.f32 %v619, %v322
    %v621 = vadd.f32 %v620, 1e-05
    %v622 = vrsqrt.pop %v621
    %v623 = vmul.f32 %v622, %v621
    %v624 = vmul.f32 %v623, %v622
    %v625 = vmul.f32 0.5, %v624
    %v626 = vsub.f32 1.5, %v625
    %v627 = vmul.f32 %v622, %v626
    %vm628 = vweird.f32 %v621
    %vm629 = vweird.f32 %v622
    %vm630 = vmor %vm628, %vm629
    %v631 = vsel %vm630, %v622, %v627
    %v632 = vperm.slane %v107, 4
    %v633 = vmul.f32 %v631, %v632
    %v634 = vmul.f32 %v616, %v633
    %v635 = vperm.slane %v107, 5
    %v636 = vadd.f32 %v634, %v635
    %v637 = vxor.u32 %v636, 2147483648
    %v638 = vmul.f32 %v637, 1.442695
    %v639 = vpow.pop %v638
    %v640 = vadd.f32 %v639, 1.0
    %v641 = vrcp.pop %v640
    %v642 = vmul.f32 %v640, %v641
    %v643 = vsub.f32 1.0, %v642
    %v644 = vmul.f32 %v641, %v643
    %v645 = vadd.f32 %v641, %v644
    %vm646 = vweird.f32 %v640
    %vm647 = vweird.f32 %v641
    %vm648 = vmor %vm646, %vm647
    %v649 = vsel %vm648, %v641, %v645
    %v650 = vand.u32 2147483647, %v640
    %vm651 = vcmp.eq.f32.partialorder %v650, 8.507059e+37
    %v652 = vand.u32 %v640, 2147483648
    %v653 = vor.u32 1.1754944e-38, %v652
    %v654 = vsel %vm651, %v653, %v649
    %v655 = vmul.f32 1.0, %v654
    %v656 = vtanh.pop %v636
    %657 = vrot.lane.b32.xlu0 %v105, 96
    %v658 = vpop.permute.xlu0 %657
    %v660 = vmul.f32 %v655, %v658
    %662 = vrot.lane.b32.xlu0 %v656, 32
    %v663 = vpop.permute.xlu0 %662
    %v665 = vmul.f32 %v655, %v663
    %667 = vrot.lane.b32.xlu0 %v665, 32
    %v668 = vpop.permute.xlu0 %667
    %v670 = vadd.f32 %v660, %v668
    %672 = vrot.lane.b32.xlu0 %v670, 96
    %v673 = vpop.permute.xlu0 %672
    %v675 = vsel %vm384, %v673, 0.0
    %676 = vadd.xlane.f32.xlu0 %v675
    %v677 = vpop.xlane.xlu0 %676
    %v678 = vmul.f32 %v677, %v394
    %v679 = vsub.f32 %v670, %v678
    %v680 = vmul.f32 %v679, %v679
    %682 = vrot.lane.b32.xlu0 %v680, 96
    %v683 = vpop.permute.xlu0 %682
    %v685 = vsel %vm384, %v683, 0.0
    %686 = vadd.xlane.f32.xlu0 %v685
    %v687 = vpop.xlane.xlu0 %686
    %v688 = vmul.f32 %v687, %v394
    %v689 = vadd.f32 %v688, 1e-05
    %v690 = vrsqrt.pop %v689
    %v691 = vmul.f32 %v690, %v689
    %v692 = vmul.f32 %v691, %v690
    %v693 = vmul.f32 0.5, %v692
    %v694 = vsub.f32 1.5, %v693
    %v695 = vmul.f32 %v690, %v694
    %vm696 = vweird.f32 %v689
    %vm697 = vweird.f32 %v690
    %vm698 = vmor %vm696, %vm697
    %v699 = vsel %vm698, %v690, %v695
    %v700 = vperm.slane %v108, 2
    %v701 = vmul.f32 %v699, %v700
    %703 = vrot.lane.b32.xlu0 %v701, 32
    %v704 = vpop.permute.xlu0 %703
    %v706 = vmul.f32 %v679, %v704
    %v707 = vperm.slane %v108, 3
    %709 = vrot.lane.b32.xlu0 %v707, 32
    %v710 = vpop.permute.xlu0 %709
    %v712 = vadd.f32 %v706, %v710
    %v713 = vtanh.pop %v712
    %715 = vrot.lane.b32.xlu0 %v713, 32
    %v716 = vpop.permute.xlu0 %715
    %v718 = vmul.f32 %v655, %v716
    %v719 = vpack.c.bf16 %v718, %v718
    %v720 = vld [vmem:[#allocation9 + $0x20] sm:$0xf]
    %v721 = vld [vmem:[#allocation9 + $0x24] sm:$0xf]
    %v722 = vld [vmem:[#allocation9 + $0x28] sm:$0xf]
    %v723 = vld [vmem:[#allocation9 + $0x2c] sm:$0xf]
    %v724 = vperm.slane %v108, 4
    %726 = vrot.lane.b32.xlu0 %v719, 64
    %v727 = vpop.permute.xlu0 %726
    %v732 = vunpack.c.l.b16 %v720
    %v733 = vunpack.c.l.b16 %v721
    %v734 = vunpack.c.l.b16 %v722
    %v735 = vunpack.c.l.b16 %v723
    %v736 = vpack.c.b16 %v733, %v732
    %v737 = vpack.c.b16 %v735, %v734
    %v741 = vsel %vm384, %v727, 0
    %743 = vmatpush.bf16.msra.mxu0 0
    %744 = vmatpush.bf16.msra.mxu0 0
    %745 = vmatpush.bf16.msra.mxu0 0
    %746 = vmatpush.bf16.msra.mxu0 0
    %747 = vmatpush.bf16.msra.mxu0 0
    %748 = vmatpush.bf16.msra.mxu0 0
    %749 = vmatpush.bf16.msra.mxu0 %v737
    %750 = vmatpush.bf16.msra.mxu0 %v736
    %751 = vmatmul.bf16.gmra.mxu0 %v741
    %v752 = vpop.f32.mrf.mxu0
    %v753 = vadd.f32 %v724, %v752
    %v754 = vpop.f32.mrf.mxu0
    %755 = vdwg.mxu0
    %757 = vrot.lane.b32.xlu0 %v435, 64
    %v758 = vpop.permute.xlu0 %757
    %761 = vrot.lane.b32.xlu0 %v575, 96
    %v762 = vpop.permute.xlu0 %761
    %764 = vrot.lane.b32.xlu0 %v670, 32
    %v765 = vpop.permute.xlu0 %764
    %v767 = vsel %vm384, %v758, %v762
    %vm768 = vcmask 523264
    %v769 = vsel %vm768, %v767, %v718
    %vm770 = vcmask 785408
    %v771 = vsel %vm770, %v769, 0.0
    %v772 = vsel %vm384, %v382, %v527
    %v773 = vsel %vm768, %v772, %v765
    %v774 = vsel %vm770, %v773, 0.0
    %775 = vst [vmem:[#allocation2] sm:$0xff] %v771
    %776 = vst [vmem:[#allocation2 + $0x8] sm:$0xff] %v774
    %777 = vst [vmem:[#allocation12] sm:$0xff] %v753
    %778 = vst [vmem:[#allocation12 + $0x8] sm:$0xff] %v771
    %779 = vst [vmem:[#allocation12 + $0x10] sm:$0xff] %v774
    // Predicated region
    $region46: #{tpu_custom_call.1} parent=1 // pred_check
      _
    $region47: #{tpu_custom_call.1} parent=1 // pred_check_branch
      %781 = sbr.rel (0) target = $region49
    $region48: #{tpu_custom_call.1} parent=1 // pred_region
      %783 = vsyncadd [#allocation5], 0
      %s785 = sshll.u32 [#allocation12], 4
      %s786 = int_to_ptr.vmem [resolvable:$true] %s785
      %s787 = sshll.u32 %s5, 4
      %s788 = int_to_ptr.hbm [resolvable:$true] %s787
      %790 = dma.vmem_to_hbm [thread:$0]  %s786, 384, %s788, [#allocation5]
    $region49: #{tpu_custom_call.1} parent=1 // pred_fallthru
      _
    // Predicated region
    $region50: #{tpu_custom_call.1} parent=1 // pred_check
      _
    $region51: #{tpu_custom_call.1} parent=1 // pred_check_branch
      %792 = sbr.rel (0) target = $region53
    $region52: #{tpu_custom_call.1} parent=1 // pred_region
      %794 = dma.done [#allocation5], 384
    $region53: #{tpu_custom_call.1} parent=1 // pred_fallthru
      _
    %795 = vsyncpa [#allocation4], 1
    %796 = vsyncpa [#allocation7], 1
    %797 = vsyncpa [#allocation10], 1
    %798 = vsyncpa [#allocation5], 1

</llo_original>
